<compile_context>
chip_gen: v7x
topology: tpu7x:2x2x1
jax: 0.10.0
libtpu: 0.0.40
codegen_flags: <defaults>
</compile_context>

<pallas_src>
import jax
import jax.numpy as jnp
from jax.experimental import pallas as pl
from jax.experimental.pallas import tpu as pltpu


_MIN_PALLAS_ELEMS = 256 * 1024        # below this, fused XLA affine wins
_BLOCK_BYTES = 2 * 1024 * 1024        # ~2 MiB per block (x2 in + x2 out bufs)
_TARGET_STEPS = 8                     # >= 8 grid steps: megacore + pipelining


def _round_up(n, m):
    return ((n + m - 1) // m) * m


def _affine_kernel(scale_ref, bias_ref, x_ref, o_ref):
    # scale_ref / bias_ref: (1,) f32 scalars in SMEM
    # x_ref / o_ref:        (tile_r, lanes) tiles in VMEM, native dtype
    x = x_ref[...].astype(jnp.float32)
    o_ref[...] = (x * scale_ref[0] + bias_ref[0]).astype(o_ref.dtype)


def _forward_impl(x, w1, b1, w3, b3):
    orig_shape = x.shape
    dt = x.dtype
    n = x.size

    # Fold the two 1x1 single-channel convs into one affine map (exact in f32).
    scale = w1.reshape(()).astype(jnp.float32) + w3.reshape(()).astype(jnp.float32)
    bias = b1.reshape(()).astype(jnp.float32) + b3.reshape(()).astype(jnp.float32)

    if n < _MIN_PALLAS_ELEMS or n % 128 != 0:
        # Small or awkwardly-sized input: a Pallas launch plus pad/slice glue
        # would only add overhead; XLA fuses this into one roofline pass.
        return (x.astype(jnp.float32) * scale + bias).astype(dt)

    # Lane-dense slab: largest lane width in {512, 256, 128} that divides n,
    # so the reshape is a free bitcast (no pad, no copy).
    if n % 512 == 0:
        lanes = 512
    elif n % 256 == 0:
        lanes = 256
    else:
        lanes = 128
    rows = n // lanes

    itemsize = jnp.dtype(dt).itemsize
    sub = max(8, 32 // itemsize)      # sublane multiple: 8 f32 / 16 bf16 / 32 i8

    # Row-block size: ~_BLOCK_BYTES per block, but never fewer than
    # _TARGET_STEPS grid steps (keeps both v7x TCs busy + overlapped DMA).
    cap = max(sub, (_BLOCK_BYTES // (lanes * itemsize)) // sub * sub)
    tile_r = min(cap, _round_up(pl.cdiv(rows, _TARGET_STEPS), sub))
    tile_r = max(tile_r, sub)
    grid = (pl.cdiv(rows, tile_r),)   # last block may be partial (masked store)

    x2d = x.reshape(rows, lanes)      # contiguous -> free bitcast

    out2d = pl.pallas_call(
        _affine_kernel,
        out_shape=jax.ShapeDtypeStruct((rows, lanes), dt),
        grid=grid,
        in_specs=[
            pl.BlockSpec(memory_space=pltpu.MemorySpace.SMEM),     # scale
            pl.BlockSpec(memory_space=pltpu.MemorySpace.SMEM),     # bias
            pl.BlockSpec((tile_r, lanes), lambda i: (i, 0)),       # x tile
        ],
        out_specs=pl.BlockSpec((tile_r, lanes), lambda i: (i, 0)),
        compiler_params=pltpu.CompilerParams(
            dimension_semantics=("parallel",),
            vmem_limit_bytes=32 * 1024 * 1024,
        ),
    )(scale.reshape(1), bias.reshape(1), x2d)

    return out2d.reshape(orig_shape)


# jit so the (free) reshapes and the scalar folds sit next to the custom call.
model_forward = jax.jit(_forward_impl)


def _reference(x, w1, b1, w3, b3):
    scale = w1.reshape(()).astype(jnp.float32) + w3.reshape(()).astype(jnp.float32)
    bias = b1.reshape(()).astype(jnp.float32) + b3.reshape(()).astype(jnp.float32)
    return (x.astype(jnp.float32) * scale + bias).astype(x.dtype)


if __name__ == "__main__":
    key = jax.random.PRNGKey(0)
    k_x, k_w1, k_b1, k_w3, k_b3 = jax.random.split(key, 5)

    # Deterministic parameter init (fan_in = 1 -> uniform(-1, 1), matching the
    # PyTorch default init bound 1/sqrt(fan_in) = 1).
    w1 = jax.random.uniform(k_w1, (1, 1, 1), jnp.float32, -1.0, 1.0)
    b1 = jax.random.uniform(k_b1, (1,), jnp.float32, -1.0, 1.0)
    w3 = jax.random.uniform(k_w3, (1, 1, 1, 1, 1), jnp.float32, -1.0, 1.0)
    b3 = jax.random.uniform(k_b3, (1,), jnp.float32, -1.0, 1.0)

    # 1) Main Pallas path: NCDHW (Conv3d view), 524288 f32 elems -> lanes=512,
    #    rows=1024, tile_r=128, 8 grid steps, no pad/copy glue.
    x = jax.random.normal(k_x, (2, 1, 16, 128, 128), dtype=jnp.float32)
    out = jax.block_until_ready(model_forward(x, w1, b1, w3, b3))
    assert out.shape == x.shape and out.dtype == x.dtype
    assert jnp.allclose(out, _reference(x, w1, b1, w3, b3), atol=1e-6, rtol=1e-6)

    # 2) Partial last row-block (rows=586 not a multiple of tile_r): exercises
    #    Pallas's masked store on the final block.
    x_odd = jax.random.normal(k_x, (1, 1, 293, 32, 32), dtype=jnp.float32)
    out_odd = jax.block_until_ready(model_forward(x_odd, w1, b1, w3, b3))
    assert out_odd.shape == x_odd.shape
    assert jnp.allclose(out_odd, _reference(x_odd, w1, b1, w3, b3),
                        atol=1e-6, rtol=1e-6)

    # 3) Native bf16 path (half the HBM traffic, in-kernel f32 compute).
    x_bf16 = jax.random.normal(k_x, (2, 1, 16, 128, 128), dtype=jnp.bfloat16)
    out_bf16 = jax.block_until_ready(model_forward(x_bf16, w1, b1, w3, b3))
    assert out_bf16.shape == x_bf16.shape and out_bf16.dtype == jnp.bfloat16
    assert jnp.allclose(out_bf16.astype(jnp.float32),
                        _reference(x_bf16, w1, b1, w3, b3).astype(jnp.float32),
                        atol=1e-2, rtol=1e-2)

    # 4) Small-input fallback (pure fused-XLA affine).
    x_small = jax.random.normal(k_x, (2, 1, 4, 8, 8), dtype=jnp.float32)
    out_small = jax.block_until_ready(model_forward(x_small, w1, b1, w3, b3))
    assert out_small.shape == x_small.shape
    assert jnp.allclose(out_small, _reference(x_small, w1, b1, w3, b3),
                        atol=1e-6, rtol=1e-6)

    print("KERNEL_OK")
</pallas_src>

<mosaic_0001>
module attributes {stable_mosaic.version = 11 : i64} {
  func.func @_affine_kernel(%arg0: i32, %arg1: memref<1xf32, #tpu.memory_space<smem>>, %arg2: memref<1xf32, #tpu.memory_space<smem>>, %arg3: memref<128x512xf32, #tpu.memory_space<vmem>>, %arg4: memref<128x512xf32, #tpu.memory_space<vmem>>) attributes {dimension_semantics = [#tpu.dimension_semantics<parallel>], iteration_bounds = array<i64: 8>, scalar_prefetch = 0 : i64, scratch_operands = 0 : i64, tpu.core_type = #tpu.core_type<tc>, window_params = [{transform_indices = @transform_0, window_bounds = array<i64: 1>}, {transform_indices = @transform_1, window_bounds = array<i64: 1>}, {transform_indices = @transform_2, window_bounds = array<i64: 128, 512>}, {transform_indices = @transform_3, window_bounds = array<i64: 128, 512>}]} {
    %c0 = arith.constant 0 : index
    %c0_0 = arith.constant 0 : index
    %0 = vector.load %arg3[%c0, %c0_0] : memref<128x512xf32, #tpu.memory_space<vmem>>, vector<128x512xf32>
    %c0_1 = arith.constant 0 : index
    %1 = memref.load %arg1[%c0_1] : memref<1xf32, #tpu.memory_space<smem>>
    %2 = vector.broadcast %1 : f32 to vector<128x512xf32>
    %3 = arith.mulf %0, %2 : vector<128x512xf32>
    %c0_2 = arith.constant 0 : index
    %4 = memref.load %arg2[%c0_2] : memref<1xf32, #tpu.memory_space<smem>>
    %5 = vector.broadcast %4 : f32 to vector<128x512xf32>
    %6 = arith.addf %3, %5 : vector<128x512xf32>
    %c0_3 = arith.constant 0 : index
    %c0_4 = arith.constant 0 : index
    %7 = vector.load %arg4[%c0_3, %c0_4] : memref<128x512xf32, #tpu.memory_space<vmem>>, vector<128x512xf32>
    tpu.vector_store %arg4[%c0_3, %c0_4], %6 {strides = array<i32>} : memref<128x512xf32, #tpu.memory_space<vmem>>, vector<128x512xf32>,
    return
  }
  func.func @transform_0(%arg0: i32) -> i32 {
    %c0_i32 = arith.constant 0 : i32
    %c0_i32_0 = arith.constant 0 : i32
    return %c0_i32 : i32
  }
  func.func @transform_1(%arg0: i32) -> i32 {
    %c0_i32 = arith.constant 0 : i32
    %c0_i32_0 = arith.constant 0 : i32
    return %c0_i32 : i32
  }
  func.func @transform_2(%arg0: i32) -> (i32, i32) {
    %c0_i32 = arith.constant 0 : i32
    %c0_i32_0 = arith.constant 0 : i32
    return %arg0, %c0_i32 : i32, i32
  }
  func.func @transform_3(%arg0: i32) -> (i32, i32) {
    %c0_i32 = arith.constant 0 : i32
    %c0_i32_0 = arith.constant 0 : i32
    return %arg0, %c0_i32 : i32, i32
  }
}

</mosaic_0001>

<llo_original>
// kernel: _forward_impl.1
$region0: #{_forward_impl.1}
  #allocation0 [shape = 'u32[]', space=smem, size = 0x4, offset = 0x4, fixed_abs, tag = 'smem constant byte address 0x4 - core index']
  #allocation1 [shape = 'u32[144,128]{1,0:T(1,128)}', space=vmem, size = 0x12000, scoped, tag = 'internal scratch']
  #allocation2 [shape = 'f32[1]{0:T(128)S(6)}', space=smem, size = 0x200, scoped, tag = 'scoped memory for _forward_impl.1']
  #allocation3 [shape = 'f32[1]{0:T(128)S(6)}', space=smem, size = 0x200, scoped, tag = 'scoped memory for _forward_impl.1']
  %s0 = inlined_call_operand.<no memory space> [shape: f32[1], index: 0, kind: input, shape index: {}]
  %s1 = inlined_call_operand.<no memory space> [shape: f32[1], index: 1, kind: input, shape index: {}]
  %s2 = inlined_call_operand.vmem [shape: f32[1024,512], index: 2, kind: input, shape index: {}]
  %s3 = inlined_call_operand.vmem [shape: f32[1024,512], index: 3, kind: output, shape index: {}]
  %s4 = sld [smem:[#allocation0]]
  $region45: #{_forward_impl.1} parent=0
    _
  %s6 = ssub.s32 1, %s4
  %s7 = scalar_select 0, %s6, %s4
  %8 = sst [smem:[#allocation2]] %s0
  %9 = sst [smem:[#allocation3]] %s1
  loop: start=0, step=1, limit=10
  $region2: #{_forward_impl.1} parent=0 // loop_pre_header
    _
  $region3: #{_forward_impl.1} parent=0 // loop_header
    %s11 = sphi 0, %s15
    %p12 = scmp.ge.s32.totalorder %s11, 10
    %s19 = sphi 0, %s19
    %s21 = sphi 0, %s19
    %s22 = sphi 0, %s21
    %s36 = sphi 0, %s22
    %s40 = sphi 0, %s40
    %s42 = sphi 0, %s40
    %s43 = sphi 0, %s42
    %s57 = sphi 0, %s43
    %s63 = sphi 0, %s65
    %s66 = sphi 0, %s63
    %s67 = sphi 0, %s66
    %s83 = sphi 0, %s67
    %s89 = sphi 0, %s91
    %s92 = sphi 0, %s89
    %s93 = sphi 0, %s92
    %s109 = sphi 0, %s93
  $region4: #{_forward_impl.1} parent=0 // loop_header_branch
    %14 = sbr.rel (%p12) target = $region8
  $region5: #{_forward_impl.1} parent=0 // loop_body
    %s16 = ssub.s32 %s11, 1
    %s17 = ssub.s32 %s11, 2
    %s18 = sadd.s32 %s11, 1
    %s20 = sadd.s32 %s19, 1
    %p23 = scmp.eq.s32.totalorder %s11, 7
    %p24 = scmp.ne.s32.totalorder %s19, %s21
    %p25 = scmp.eq.s32.totalorder %s11, 0
    %p26 = por %p24, %p25
    %p27 = scmp.ne.s32.totalorder %s19, %s21
    %p28 = scmp.eq.s32.totalorder %s16, 7
    %p29 = por %p27, %p28
    %p30 = scmp.ne.s32.totalorder %s21, %s22
    %p31 = scmp.eq.s32.totalorder %s16, 0
    %p32 = por %p30, %p31
    %p33 = scmp.ne.s32.totalorder %s21, %s22
    %p34 = scmp.eq.s32.totalorder %s17, 7
    %p35 = por %p33, %p34
    %p37 = scmp.ne.s32.totalorder %s22, %s36
    %p38 = scmp.eq.s32.totalorder %s17, 0
    %p39 = por %p37, %p38
    %s41 = sadd.s32 %s40, 1
    %p44 = scmp.eq.s32.totalorder %s11, 7
    %p45 = scmp.ne.s32.totalorder %s40, %s42
    %p46 = scmp.eq.s32.totalorder %s11, 0
    %p47 = por %p45, %p46
    %p48 = scmp.ne.s32.totalorder %s40, %s42
    %p49 = scmp.eq.s32.totalorder %s16, 7
    %p50 = por %p48, %p49
    %p51 = scmp.ne.s32.totalorder %s42, %s43
    %p52 = scmp.eq.s32.totalorder %s16, 0
    %p53 = por %p51, %p52
    %p54 = scmp.ne.s32.totalorder %s42, %s43
    %p55 = scmp.eq.s32.totalorder %s17, 7
    %p56 = por %p54, %p55
    %p58 = scmp.ne.s32.totalorder %s43, %s57
    %p59 = scmp.eq.s32.totalorder %s17, 0
    %p60 = por %p58, %p59
    %s61 = ssub.s32 %s11, %s18
    %p62 = scmp.eq.s32.totalorder %s61, 0
    %s64 = sadd.s32 %s63, 1
    %s65 = scalar_select %p62, %s63, %s64
    %p68 = pneg %p62
    %p69 = scmp.eq.s32.totalorder %s11, 7
    %p70 = por %p68, %p69
    %p71 = scmp.ne.s32.totalorder %s63, %s66
    %p72 = scmp.eq.s32.totalorder %s11, 0
    %p73 = por %p71, %p72
    %p74 = scmp.ne.s32.totalorder %s63, %s66
    %p75 = scmp.eq.s32.totalorder %s16, 7
    %p76 = por %p74, %p75
    %p77 = scmp.ne.s32.totalorder %s66, %s67
    %p78 = scmp.eq.s32.totalorder %s16, 0
    %p79 = por %p77, %p78
    %p80 = scmp.ne.s32.totalorder %s66, %s67
    %p81 = scmp.eq.s32.totalorder %s17, 7
    %p82 = por %p80, %p81
    %p84 = scmp.ne.s32.totalorder %s67, %s83
    %p85 = scmp.eq.s32.totalorder %s17, 0
    %p86 = por %p84, %p85
    %s87 = ssub.s32 %s11, %s18
    %p88 = scmp.eq.s32.totalorder %s87, 0
    %s90 = sadd.s32 %s89, 1
    %s91 = scalar_select %p88, %s89, %s90
    %p94 = pneg %p88
    %p95 = scmp.eq.s32.totalorder %s11, 7
    %p96 = por %p94, %p95
    %p97 = scmp.ne.s32.totalorder %s89, %s92
    %p98 = scmp.eq.s32.totalorder %s11, 0
    %p99 = por %p97, %p98
    %p100 = scmp.ne.s32.totalorder %s89, %s92
    %p101 = scmp.eq.s32.totalorder %s16, 7
    %p102 = por %p100, %p101
    %p103 = scmp.ne.s32.totalorder %s92, %s93
    %p104 = scmp.eq.s32.totalorder %s16, 0
    %p105 = por %p103, %p104
    %p106 = scmp.ne.s32.totalorder %s92, %s93
    %p107 = scmp.eq.s32.totalorder %s17, 7
    %p108 = por %p106, %p107
    %p110 = scmp.ne.s32.totalorder %s93, %s109
    %p111 = scmp.eq.s32.totalorder %s17, 0
    %p112 = por %p110, %p111
    %p113 = scmp.le.s32.totalorder 1, %s11
    %p114 = scmp.lt.s32.totalorder %s11, 9
    %p115 = pnand %p113, %p114
    %p116 = pneg %p115
    // Predicated region
    $region9: #{_forward_impl.1} parent=5 // pred_check
      _
    $region10: #{_forward_impl.1} parent=5 // pred_check_branch
      %118 = sbr.rel (%p115) target = $region12
    $region11: #{_forward_impl.1} parent=5 // pred_region
      %s119 = ssub.s32 %s11, 1
      // Predicated region
      $region13: #{_forward_impl.1} parent=11 // pred_check
        %p120 = pneg %p32
      $region14: #{_forward_impl.1} parent=11 // pred_check_branch
        %122 = sbr.rel (%p120) target = $region16
      $region15: #{_forward_impl.1} parent=11 // pred_region
        _
      $region16: #{_forward_impl.1} parent=11 // pred_fallthru
        _
      // Predicated region
      $region17: #{_forward_impl.1} parent=11 // pred_check
        %p123 = pneg %p53
      $region18: #{_forward_impl.1} parent=11 // pred_check_branch
        %125 = sbr.rel (%p123) target = $region20
      $region19: #{_forward_impl.1} parent=11 // pred_region
        _
      $region20: #{_forward_impl.1} parent=11 // pred_fallthru
        _
    $region12: #{_forward_impl.1} parent=5 // pred_fallthru
      _
    %p126 = scmp.lt.s32.totalorder %s11, 8
    // Predicated region
    $region21: #{_forward_impl.1} parent=5 // pred_check
      %p127 = pneg %p126
    $region22: #{_forward_impl.1} parent=5 // pred_check_branch
      %129 = sbr.rel (%p127) target = $region24
    $region23: #{_forward_impl.1} parent=5 // pred_region
      // Predicated region
      $region25: #{_forward_impl.1} parent=23 // pred_check
        %p130 = pneg %p73
      $region26: #{_forward_impl.1} parent=23 // pred_check_branch
        %132 = sbr.rel (%p130) target = $region28
      $region27: #{_forward_impl.1} parent=23 // pred_region
        %s133 = smul.u32 16, %s11
        %p134 = scmp.lt.s32.totalorder %s133, 127
        %s135 = scalar_select %p134, %s133, 127
        %s136 = smul.addr %s135, 4
        %s137 = smul.addr %s136, 8
        %s138 = scalar_lea.vmem %s2, %s137
        %s139 = smul.u32 16, %s11
      $region28: #{_forward_impl.1} parent=23 // pred_fallthru
        _
    $region24: #{_forward_impl.1} parent=5 // pred_fallthru
      _
    %p140 = scmp.le.s32.totalorder 1, %s11
    %p141 = scmp.lt.s32.totalorder %s11, 9
    %p142 = pnand %p140, %p141
    %p143 = pneg %p142
    // Predicated region
    $region29: #{_forward_impl.1} parent=5 // pred_check
      _
    $region30: #{_forward_impl.1} parent=5 // pred_check_branch
      %145 = sbr.rel (%p142) target = $region32
    $region31: #{_forward_impl.1} parent=5 // pred_region
      %s146 = ssub.s32 %s11, 1
      %p147 = pneg %p32
      %p148 = pneg %p29
      %p149 = pneg %p53
      %p150 = pneg %p50
      %s151 = smul.u32 16, %s16
      %p152 = scmp.lt.s32.totalorder %s151, 127
      %s153 = scalar_select %p152, %s151, 127
      %s154 = smul.addr %s153, 4
      %s155 = smul.addr %s154, 8
      %s156 = scalar_lea.vmem %s2, %s155
      %p157 = pneg %p79
      %p158 = pneg %p76
      %p159 = pneg %p105
      %p160 = pneg %p102
      %s161 = smul.u32 16, %s16
      %p162 = scmp.lt.s32.totalorder %s161, 127
      %s163 = scalar_select %p162, %s161, 127
      %s164 = smul.addr %s163, 4
      %s165 = smul.addr %s164, 8
      %s166 = scalar_lea.vmem %s3, %s165
      %s167 = smul.u32 16, %s16
      %p168 = scmp.lt.s32.totalorder %s167, 127
      %s169 = scalar_select %p168, %s167, 127
      %s170 = smul.addr %s169, 4
      %s171 = smul.addr %s170, 8
      %s172 = scalar_lea.vmem %s2, %s171
      %s173 = smul.u32 16, %s16
      %s174 = smul.u32 16, %s16
      %p175 = scmp.lt.s32.totalorder %s174, 127
      %s176 = scalar_select %p175, %s174, 127
      %s177 = smul.addr %s176, 4
      %s178 = smul.addr %s177, 8
      %s179 = scalar_lea.vmem %s3, %s178
      %s180 = smul.u32 16, %s16
      %v181 = vld [vmem:[%s172] sm:$0xff]
      %v182 = vld [vmem:[%s172 + $0x8] sm:$0xff]
      %v183 = vld [vmem:[%s172 + $0x10] sm:$0xff]
      %v184 = vld [vmem:[%s172 + $0x18] sm:$0xff]
      %v185 = vld [vmem:[%s172 + $0x20] sm:$0xff]
      %v186 = vld [vmem:[%s172 + $0x28] sm:$0xff]
      %v187 = vld [vmem:[%s172 + $0x30] sm:$0xff]
      %v188 = vld [vmem:[%s172 + $0x38] sm:$0xff]
      %v189 = vld [vmem:[%s172 + $0x40] sm:$0xff]
      %v190 = vld [vmem:[%s172 + $0x48] sm:$0xff]
      %v191 = vld [vmem:[%s172 + $0x50] sm:$0xff]
      %v192 = vld [vmem:[%s172 + $0x58] sm:$0xff]
      %v193 = vld [vmem:[%s172 + $0x60] sm:$0xff]
      %v194 = vld [vmem:[%s172 + $0x68] sm:$0xff]
      %v195 = vld [vmem:[%s172 + $0x70] sm:$0xff]
      %v196 = vld [vmem:[%s172 + $0x78] sm:$0xff]
      %v197 = vld [vmem:[%s172 + $0x80] sm:$0xff]
      %v198 = vld [vmem:[%s172 + $0x88] sm:$0xff]
      %v199 = vld [vmem:[%s172 + $0x90] sm:$0xff]
      %v200 = vld [vmem:[%s172 + $0x98] sm:$0xff]
      %v201 = vld [vmem:[%s172 + $0xa0] sm:$0xff]
      %v202 = vld [vmem:[%s172 + $0xa8] sm:$0xff]
      %v203 = vld [vmem:[%s172 + $0xb0] sm:$0xff]
      %v204 = vld [vmem:[%s172 + $0xb8] sm:$0xff]
      %v205 = vld [vmem:[%s172 + $0xc0] sm:$0xff]
      %v206 = vld [vmem:[%s172 + $0xc8] sm:$0xff]
      %v207 = vld [vmem:[%s172 + $0xd0] sm:$0xff]
      %v208 = vld [vmem:[%s172 + $0xd8] sm:$0xff]
      %v209 = vld [vmem:[%s172 + $0xe0] sm:$0xff]
      %v210 = vld [vmem:[%s172 + $0xe8] sm:$0xff]
      %v211 = vld [vmem:[%s172 + $0xf0] sm:$0xff]
      %v212 = vld [vmem:[%s172 + $0xf8] sm:$0xff]
      %v213 = vld [vmem:[%s172 + $0x100] sm:$0xff]
      %v214 = vld [vmem:[%s172 + $0x108] sm:$0xff]
      %v215 = vld [vmem:[%s172 + $0x110] sm:$0xff]
      %v216 = vld [vmem:[%s172 + $0x118] sm:$0xff]
      %v217 = vld [vmem:[%s172 + $0x120] sm:$0xff]
      %v218 = vld [vmem:[%s172 + $0x128] sm:$0xff]
      %v219 = vld [vmem:[%s172 + $0x130] sm:$0xff]
      %v220 = vld [vmem:[%s172 + $0x138] sm:$0xff]
      %v221 = vld [vmem:[%s172 + $0x140] sm:$0xff]
      %v222 = vld [vmem:[%s172 + $0x148] sm:$0xff]
      %v223 = vld [vmem:[%s172 + $0x150] sm:$0xff]
      %v224 = vld [vmem:[%s172 + $0x158] sm:$0xff]
      %v225 = vld [vmem:[%s172 + $0x160] sm:$0xff]
      %v226 = vld [vmem:[%s172 + $0x168] sm:$0xff]
      %v227 = vld [vmem:[%s172 + $0x170] sm:$0xff]
      %v228 = vld [vmem:[%s172 + $0x178] sm:$0xff]
      %v229 = vld [vmem:[%s172 + $0x180] sm:$0xff]
      %v230 = vld [vmem:[%s172 + $0x188] sm:$0xff]
      %v231 = vld [vmem:[%s172 + $0x190] sm:$0xff]
      %v232 = vld [vmem:[%s172 + $0x198] sm:$0xff]
      %v233 = vld [vmem:[%s172 + $0x1a0] sm:$0xff]
      %v234 = vld [vmem:[%s172 + $0x1a8] sm:$0xff]
      %v235 = vld [vmem:[%s172 + $0x1b0] sm:$0xff]
      %v236 = vld [vmem:[%s172 + $0x1b8] sm:$0xff]
      %v237 = vld [vmem:[%s172 + $0x1c0] sm:$0xff]
      %v238 = vld [vmem:[%s172 + $0x1c8] sm:$0xff]
      %v239 = vld [vmem:[%s172 + $0x1d0] sm:$0xff]
      %v240 = vld [vmem:[%s172 + $0x1d8] sm:$0xff]
      %v241 = vld [vmem:[%s172 + $0x1e0] sm:$0xff]
      %v242 = vld [vmem:[%s172 + $0x1e8] sm:$0xff]
      %v243 = vld [vmem:[%s172 + $0x1f0] sm:$0xff]
      %v244 = vld [vmem:[%s172 + $0x1f8] sm:$0xff]
      %s245 = sld [smem:[#allocation2]]
      %v246 = vstv %s245
      %v247 = vmul.f32 %v181, %v246
      %v248 = vmul.f32 %v182, %v246
      %v249 = vmul.f32 %v183, %v246
      %v250 = vmul.f32 %v184, %v246
      %v251 = vmul.f32 %v185, %v246
      %v252 = vmul.f32 %v186, %v246
      %v253 = vmul.f32 %v187, %v246
      %v254 = vmul.f32 %v188, %v246
      %v255 = vmul.f32 %v189, %v246
      %v256 = vmul.f32 %v190, %v246
      %v257 = vmul.f32 %v191, %v246
      %v258 = vmul.f32 %v192, %v246
      %v259 = vmul.f32 %v193, %v246
      %v260 = vmul.f32 %v194, %v246
      %v261 = vmul.f32 %v195, %v246
      %v262 = vmul.f32 %v196, %v246
      %v263 = vmul.f32 %v197, %v246
      %v264 = vmul.f32 %v198, %v246
      %v265 = vmul.f32 %v199, %v246
      %v266 = vmul.f32 %v200, %v246
      %v267 = vmul.f32 %v201, %v246
      %v268 = vmul.f32 %v202, %v246
      %v269 = vmul.f32 %v203, %v246
      %v270 = vmul.f32 %v204, %v246
      %v271 = vmul.f32 %v205, %v246
      %v272 = vmul.f32 %v206, %v246
      %v273 = vmul.f32 %v207, %v246
      %v274 = vmul.f32 %v208, %v246
      %v275 = vmul.f32 %v209, %v246
      %v276 = vmul.f32 %v210, %v246
      %v277 = vmul.f32 %v211, %v246
      %v278 = vmul.f32 %v212, %v246
      %v279 = vmul.f32 %v213, %v246
      %v280 = vmul.f32 %v214, %v246
      %v281 = vmul.f32 %v215, %v246
      %v282 = vmul.f32 %v216, %v246
      %v283 = vmul.f32 %v217, %v246
      %v284 = vmul.f32 %v218, %v246
      %v285 = vmul.f32 %v219, %v246
      %v286 = vmul.f32 %v220, %v246
      %v287 = vmul.f32 %v221, %v246
      %v288 = vmul.f32 %v222, %v246
      %v289 = vmul.f32 %v223, %v246
      %v290 = vmul.f32 %v224, %v246
      %v291 = vmul.f32 %v225, %v246
      %v292 = vmul.f32 %v226, %v246
      %v293 = vmul.f32 %v227, %v246
      %v294 = vmul.f32 %v228, %v246
      %v295 = vmul.f32 %v229, %v246
      %v296 = vmul.f32 %v230, %v246
      %v297 = vmul.f32 %v231, %v246
      %v298 = vmul.f32 %v232, %v246
      %v299 = vmul.f32 %v233, %v246
      %v300 = vmul.f32 %v234, %v246
      %v301 = vmul.f32 %v235, %v246
      %v302 = vmul.f32 %v236, %v246
      %v303 = vmul.f32 %v237, %v246
      %v304 = vmul.f32 %v238, %v246
      %v305 = vmul.f32 %v239, %v246
      %v306 = vmul.f32 %v240, %v246
      %v307 = vmul.f32 %v241, %v246
      %v308 = vmul.f32 %v242, %v246
      %v309 = vmul.f32 %v243, %v246
      %v310 = vmul.f32 %v244, %v246
      %s311 = sld [smem:[#allocation3]]
      %v312 = vstv %s311
      %v313 = vadd.f32 %v247, %v312
      %v314 = vadd.f32 %v248, %v312
      %v315 = vadd.f32 %v249, %v312
      %v316 = vadd.f32 %v250, %v312
      %v317 = vadd.f32 %v251, %v312
      %v318 = vadd.f32 %v252, %v312
      %v319 = vadd.f32 %v253, %v312
      %v320 = vadd.f32 %v254, %v312
      %v321 = vadd.f32 %v255, %v312
      %v322 = vadd.f32 %v256, %v312
      %v323 = vadd.f32 %v257, %v312
      %v324 = vadd.f32 %v258, %v312
      %v325 = vadd.f32 %v259, %v312
      %v326 = vadd.f32 %v260, %v312
      %v327 = vadd.f32 %v261, %v312
      %v328 = vadd.f32 %v262, %v312
      %v329 = vadd.f32 %v263, %v312
      %v330 = vadd.f32 %v264, %v312
      %v331 = vadd.f32 %v265, %v312
      %v332 = vadd.f32 %v266, %v312
      %v333 = vadd.f32 %v267, %v312
      %v334 = vadd.f32 %v268, %v312
      %v335 = vadd.f32 %v269, %v312
      %v336 = vadd.f32 %v270, %v312
      %v337 = vadd.f32 %v271, %v312
      %v338 = vadd.f32 %v272, %v312
      %v339 = vadd.f32 %v273, %v312
      %v340 = vadd.f32 %v274, %v312
      %v341 = vadd.f32 %v275, %v312
      %v342 = vadd.f32 %v276, %v312
      %v343 = vadd.f32 %v277, %v312
      %v344 = vadd.f32 %v278, %v312
      %v345 = vadd.f32 %v279, %v312
      %v346 = vadd.f32 %v280, %v312
      %v347 = vadd.f32 %v281, %v312
      %v348 = vadd.f32 %v282, %v312
      %v349 = vadd.f32 %v283, %v312
      %v350 = vadd.f32 %v284, %v312
      %v351 = vadd.f32 %v285, %v312
      %v352 = vadd.f32 %v286, %v312
      %v353 = vadd.f32 %v287, %v312
      %v354 = vadd.f32 %v288, %v312
      %v355 = vadd.f32 %v289, %v312
      %v356 = vadd.f32 %v290, %v312
      %v357 = vadd.f32 %v291, %v312
      %v358 = vadd.f32 %v292, %v312
      %v359 = vadd.f32 %v293, %v312
      %v360 = vadd.f32 %v294, %v312
      %v361 = vadd.f32 %v295, %v312
      %v362 = vadd.f32 %v296, %v312
      %v363 = vadd.f32 %v297, %v312
      %v364 = vadd.f32 %v298, %v312
      %v365 = vadd.f32 %v299, %v312
      %v366 = vadd.f32 %v300, %v312
      %v367 = vadd.f32 %v301, %v312
      %v368 = vadd.f32 %v302, %v312
      %v369 = vadd.f32 %v303, %v312
      %v370 = vadd.f32 %v304, %v312
      %v371 = vadd.f32 %v305, %v312
      %v372 = vadd.f32 %v306, %v312
      %v373 = vadd.f32 %v307, %v312
      %v374 = vadd.f32 %v308, %v312
      %v375 = vadd.f32 %v309, %v312
      %v376 = vadd.f32 %v310, %v312
      %377 = vst [vmem:[%s179] sm:$0xff] %v313
      %378 = vst [vmem:[%s179 + $0x8] sm:$0xff] %v314
      %379 = vst [vmem:[%s179 + $0x10] sm:$0xff] %v315
      %380 = vst [vmem:[%s179 + $0x18] sm:$0xff] %v316
      %381 = vst [vmem:[%s179 + $0x20] sm:$0xff] %v317
      %382 = vst [vmem:[%s179 + $0x28] sm:$0xff] %v318
      %383 = vst [vmem:[%s179 + $0x30] sm:$0xff] %v319
      %384 = vst [vmem:[%s179 + $0x38] sm:$0xff] %v320
      %385 = vst [vmem:[%s179 + $0x40] sm:$0xff] %v321
      %386 = vst [vmem:[%s179 + $0x48] sm:$0xff] %v322
      %387 = vst [vmem:[%s179 + $0x50] sm:$0xff] %v323
      %388 = vst [vmem:[%s179 + $0x58] sm:$0xff] %v324
      %389 = vst [vmem:[%s179 + $0x60] sm:$0xff] %v325
      %390 = vst [vmem:[%s179 + $0x68] sm:$0xff] %v326
      %391 = vst [vmem:[%s179 + $0x70] sm:$0xff] %v327
      %392 = vst [vmem:[%s179 + $0x78] sm:$0xff] %v328
      %393 = vst [vmem:[%s179 + $0x80] sm:$0xff] %v329
      %394 = vst [vmem:[%s179 + $0x88] sm:$0xff] %v330
      %395 = vst [vmem:[%s179 + $0x90] sm:$0xff] %v331
      %396 = vst [vmem:[%s179 + $0x98] sm:$0xff] %v332
      %397 = vst [vmem:[%s179 + $0xa0] sm:$0xff] %v333
      %398 = vst [vmem:[%s179 + $0xa8] sm:$0xff] %v334
      %399 = vst [vmem:[%s179 + $0xb0] sm:$0xff] %v335
      %400 = vst [vmem:[%s179 + $0xb8] sm:$0xff] %v336
      %401 = vst [vmem:[%s179 + $0xc0] sm:$0xff] %v337
      %402 = vst [vmem:[%s179 + $0xc8] sm:$0xff] %v338
      %403 = vst [vmem:[%s179 + $0xd0] sm:$0xff] %v339
      %404 = vst [vmem:[%s179 + $0xd8] sm:$0xff] %v340
      %405 = vst [vmem:[%s179 + $0xe0] sm:$0xff] %v341
      %406 = vst [vmem:[%s179 + $0xe8] sm:$0xff] %v342
      %407 = vst [vmem:[%s179 + $0xf0] sm:$0xff] %v343
      %408 = vst [vmem:[%s179 + $0xf8] sm:$0xff] %v344
      %409 = vst [vmem:[%s179 + $0x100] sm:$0xff] %v345
      %410 = vst [vmem:[%s179 + $0x108] sm:$0xff] %v346
      %411 = vst [vmem:[%s179 + $0x110] sm:$0xff] %v347
      %412 = vst [vmem:[%s179 + $0x118] sm:$0xff] %v348
      %413 = vst [vmem:[%s179 + $0x120] sm:$0xff] %v349
      %414 = vst [vmem:[%s179 + $0x128] sm:$0xff] %v350
      %415 = vst [vmem:[%s179 + $0x130] sm:$0xff] %v351
      %416 = vst [vmem:[%s179 + $0x138] sm:$0xff] %v352
      %417 = vst [vmem:[%s179 + $0x140] sm:$0xff] %v353
      %418 = vst [vmem:[%s179 + $0x148] sm:$0xff] %v354
      %419 = vst [vmem:[%s179 + $0x150] sm:$0xff] %v355
      %420 = vst [vmem:[%s179 + $0x158] sm:$0xff] %v356
      %421 = vst [vmem:[%s179 + $0x160] sm:$0xff] %v357
      %422 = vst [vmem:[%s179 + $0x168] sm:$0xff] %v358
      %423 = vst [vmem:[%s179 + $0x170] sm:$0xff] %v359
      %424 = vst [vmem:[%s179 + $0x178] sm:$0xff] %v360
      %425 = vst [vmem:[%s179 + $0x180] sm:$0xff] %v361
      %426 = vst [vmem:[%s179 + $0x188] sm:$0xff] %v362
      %427 = vst [vmem:[%s179 + $0x190] sm:$0xff] %v363
      %428 = vst [vmem:[%s179 + $0x198] sm:$0xff] %v364
      %429 = vst [vmem:[%s179 + $0x1a0] sm:$0xff] %v365
      %430 = vst [vmem:[%s179 + $0x1a8] sm:$0xff] %v366
      %431 = vst [vmem:[%s179 + $0x1b0] sm:$0xff] %v367
      %432 = vst [vmem:[%s179 + $0x1b8] sm:$0xff] %v368
      %433 = vst [vmem:[%s179 + $0x1c0] sm:$0xff] %v369
      %434 = vst [vmem:[%s179 + $0x1c8] sm:$0xff] %v370
      %435 = vst [vmem:[%s179 + $0x1d0] sm:$0xff] %v371
      %436 = vst [vmem:[%s179 + $0x1d8] sm:$0xff] %v372
      %437 = vst [vmem:[%s179 + $0x1e0] sm:$0xff] %v373
      %438 = vst [vmem:[%s179 + $0x1e8] sm:$0xff] %v374
      %439 = vst [vmem:[%s179 + $0x1f0] sm:$0xff] %v375
      %440 = vst [vmem:[%s179 + $0x1f8] sm:$0xff] %v376
      %s441 = smul.u32 16, %s16
      %p442 = scmp.lt.s32.totalorder %s441, 127
      %s443 = scalar_select %p442, %s441, 127
      %s444 = smul.addr %s443, 4
      %s445 = smul.addr %s444, 8
      %s446 = scalar_lea.vmem %s3, %s445
      // Predicated region
      $region33: #{_forward_impl.1} parent=31 // pred_check
        %p447 = pneg %p102
      $region34: #{_forward_impl.1} parent=31 // pred_check_branch
        %449 = sbr.rel (%p447) target = $region36
      $region35: #{_forward_impl.1} parent=31 // pred_region
        %s450 = smul.u32 16, %s16
      $region36: #{_forward_impl.1} parent=31 // pred_fallthru
        _
    $region32: #{_forward_impl.1} parent=5 // pred_fallthru
      _
    %p451 = scmp.le.s32.totalorder 2, %s11
    // Predicated region
    $region37: #{_forward_impl.1} parent=5 // pred_check
      %p452 = pneg %p451
    $region38: #{_forward_impl.1} parent=5 // pred_check_branch
      %454 = sbr.rel (%p452) target = $region40
    $region39: #{_forward_impl.1} parent=5 // pred_region
      %s455 = ssub.s32 %s11, 2
      // Predicated region
      $region41: #{_forward_impl.1} parent=39 // pred_check
        %p456 = pneg %p108
      $region42: #{_forward_impl.1} parent=39 // pred_check_branch
        %458 = sbr.rel (%p456) target = $region44
      $region43: #{_forward_impl.1} parent=39 // pred_region
        %s459 = smul.u32 16, %s17
        %p460 = scmp.lt.s32.totalorder %s459, 127
        %s461 = scalar_select %p460, %s459, 127
        %s462 = smul.addr %s461, 4
        %s463 = smul.addr %s462, 8
        %s464 = scalar_lea.vmem %s3, %s463
      $region44: #{_forward_impl.1} parent=39 // pred_fallthru
        _
    $region40: #{_forward_impl.1} parent=5 // pred_fallthru
      _
  $region6: #{_forward_impl.1} parent=0 // loop_footer
    %s15 = sadd.s32 1, %s11
  $region7: #{_forward_impl.1} parent=0 // loop_footer_branch
    %10 = sbr.rel target = $region3
  $region8: #{_forward_impl.1} parent=0 // loop_exit
    _

</llo_original>
